<compile_context>
chip_gen: v7x
topology: tpu7x:2x2x1
jax: 0.10.0
libtpu: 0.0.40
codegen_flags: <defaults>
</compile_context>

<pallas_src>
import jax
import jax.numpy as jnp
from jax.experimental import pallas as pl
from jax.experimental.pallas import tpu as pltpu

_LANES = 128
_MAX_BLOCK_ROWS = 8192  # (8192,128) f32 tile = 4 MiB; 16 MiB double-buffered in+out


def scale_relu_kernel(w_ref, x_ref, o_ref):
    # w_ref: (1, 1) scalar in SMEM; x_ref / o_ref: (block_rows, 128) VMEM tiles.
    w = w_ref[0, 0]
    # Pure VPU: broadcast-multiply fused with the ReLU max. No MXU involved.
    o_ref[...] = jnp.maximum(x_ref[...] * w, 0.0).astype(o_ref.dtype)


def simple_nn_forward(x, w):
    """x: (N, 1) float32, w: (1, 1) float32 -> relu(x @ w.T), shape (N, 1)."""
    n = x.shape[0]
    dtype = x.dtype

    # Lane-dense view: flatten (N, 1) into (rows, 128) so every load/store is a
    # full unmasked vreg op.
    rows = pl.cdiv(n, _LANES)
    aligned = (n % _LANES) == 0

    x_flat = x.reshape(-1)
    if not aligned:
        # Pad only up to the next lane boundary (< 128 extra elements).
        # Zero padding is safe: relu(0 * w) == 0, and it is sliced off below.
        x_flat = jnp.pad(x_flat, (0, rows * _LANES - n))
    x2d = x_flat.reshape(rows, _LANES)

    # Row-tiled 1-D grid. The last block may be ragged: Pallas masks the OOB
    # writes, and whatever it reads there never reaches the real output.
    block_rows = min(_MAX_BLOCK_ROWS, rows)  # either a multiple of 8 or == rows
    grid = (pl.cdiv(rows, block_rows),)

    w_scalar = w.reshape(1, 1).astype(dtype)  # f32 here, matching the nn.Linear param

    out = pl.pallas_call(
        scale_relu_kernel,
        out_shape=jax.ShapeDtypeStruct((rows, _LANES), dtype),
        grid=grid,
        in_specs=[
            # 4-byte weight lives in SMEM: no VMEM DMA stream for a scalar.
            pl.BlockSpec(memory_space=pltpu.MemorySpace.SMEM),
            # Activations: lane-dense row tiles.
            pl.BlockSpec((block_rows, _LANES), lambda i: (i, 0)),
        ],
        out_specs=pl.BlockSpec((block_rows, _LANES), lambda i: (i, 0)),
        compiler_params=pltpu.CompilerParams(
            # Single streaming axis: "parallel" lets v7x shard rows across its
            # two TensorCores; a no-op on single-TC v5e/v6e.
            dimension_semantics=("parallel",),
            # Allow 4 MiB tiles (16 MiB double-buffered) even on v5e, whose
            # default scoped-VMEM limit is only 16 MiB. 32 MiB is well under
            # physical VMEM on v5e/v6e/v7x and leaves headroom.
            vmem_limit_bytes=32 * 1024 * 1024,
        ),
    )(w_scalar, x2d)

    if aligned:
        # Fast path: exactly one HBM read + one write; reshape is free.
        return out.reshape(n, 1)
    # Unaligned path: drop the (< 128-element) lane padding.
    return out.reshape(-1)[:n].reshape(n, 1)


if __name__ == "__main__":
    key = jax.random.PRNGKey(0)
    kx, kw = jax.random.split(key)

    # Weight init consistent with nn.Linear(1, 1, bias=False): U(-1, 1) since fan_in = 1.
    w = jax.random.uniform(kw, (1, 1), dtype=jnp.float32, minval=-1.0, maxval=1.0)

    ok = True
    # n=8: unaligned (padded) path; n=256: lane-aligned fast path (no pad/slice).
    for n in (8, 256):
        x = jax.random.normal(kx, (n, 1), dtype=jnp.float32)
        out = simple_nn_forward(x, w)
        jax.block_until_ready(out)

        ref = jnp.maximum(x @ w.T, 0.0)
        ok = ok and out.shape == (n, 1) and bool(jnp.allclose(out, ref, atol=1e-6))

    assert ok
    print("KERNEL_OK")
</pallas_src>

<mosaic_0001>
module attributes {stable_mosaic.version = 11 : i64} {
  func.func @scale_relu_kernel(%arg0: i32, %arg1: memref<1x1xf32, #tpu.memory_space<smem>>, %arg2: memref<1x128xf32, #tpu.memory_space<vmem>>, %arg3: memref<1x128xf32, #tpu.memory_space<vmem>>) attributes {dimension_semantics = [#tpu.dimension_semantics<parallel>], iteration_bounds = array<i64: 1>, scalar_prefetch = 0 : i64, scratch_operands = 0 : i64, tpu.core_type = #tpu.core_type<tc>, window_params = [{transform_indices = @transform_0, window_bounds = array<i64: 1, 1>}, {transform_indices = @transform_1, window_bounds = array<i64: 1, 128>}, {transform_indices = @transform_2, window_bounds = array<i64: 1, 128>}]} {
    %c0 = arith.constant 0 : index
    %c0_0 = arith.constant 0 : index
    %0 = memref.load %arg1[%c0, %c0_0] : memref<1x1xf32, #tpu.memory_space<smem>>
    %c0_1 = arith.constant 0 : index
    %c0_2 = arith.constant 0 : index
    %1 = vector.load %arg2[%c0_1, %c0_2] : memref<1x128xf32, #tpu.memory_space<vmem>>, vector<1x128xf32>
    %2 = vector.broadcast %0 : f32 to vector<1x128xf32>
    %3 = arith.mulf %1, %2 : vector<1x128xf32>
    %cst = arith.constant 0.000000e+00 : f32
    %4 = vector.broadcast %cst : f32 to vector<1x128xf32>
    %5 = arith.maximumf %3, %4 : vector<1x128xf32>
    %c0_3 = arith.constant 0 : index
    %c0_4 = arith.constant 0 : index
    %6 = vector.load %arg3[%c0_3, %c0_4] : memref<1x128xf32, #tpu.memory_space<vmem>>, vector<1x128xf32>
    tpu.vector_store %arg3[%c0_3, %c0_4], %5 {strides = array<i32>} : memref<1x128xf32, #tpu.memory_space<vmem>>, vector<1x128xf32>,
    return
  }
  func.func @transform_0(%arg0: i32) -> (i32, i32) {
    %c0_i32 = arith.constant 0 : i32
    %c0_i32_0 = arith.constant 0 : i32
    %c0_i32_1 = arith.constant 0 : i32
    return %c0_i32, %c0_i32_0 : i32, i32
  }
  func.func @transform_1(%arg0: i32) -> (i32, i32) {
    %c0_i32 = arith.constant 0 : i32
    %c0_i32_0 = arith.constant 0 : i32
    return %arg0, %c0_i32 : i32, i32
  }
  func.func @transform_2(%arg0: i32) -> (i32, i32) {
    %c0_i32 = arith.constant 0 : i32
    %c0_i32_0 = arith.constant 0 : i32
    return %arg0, %c0_i32 : i32, i32
  }
}

</mosaic_0001>

<llo_original>
// kernel: tpu_custom_call.1
$region0: #{tpu_custom_call.1}
  #allocation0 [shape = 'u32[]', space=smem, size = 0x4, offset = 0x4, fixed_abs, tag = 'smem constant byte address 0x4 - core index']
  #allocation1 [shape = 'u32[144,128]{1,0:T(1,128)}', space=vmem, size = 0x12000, scoped, tag = 'internal scratch']
  #allocation2 [shape = 'f32[1,1]{1,0:T(1,128)S(6)}', space=smem, size = 0x200, scoped, tag = 'scoped memory for tpu_custom_call.1']
  %s0 = inlined_call_operand.<no memory space> [shape: f32[1,1], index: 0, kind: input, shape index: {}]
  %s1 = inlined_call_operand.vmem [shape: f32[1,128], index: 1, kind: input, shape index: {}]
  %s2 = inlined_call_operand.hbm [shape: f32[1,128], index: 2, kind: output, shape index: {}]
  %s3 = sld [smem:[#allocation0]]
  $region18: #{tpu_custom_call.1} parent=0
    _
  %s5 = ssub.s32 1, %s3
  %s6 = scalar_select 0, %s5, %s3
  %7 = sst [smem:[#allocation2]] %s0
  $region1: #{tpu_custom_call.1} parent=0
    #allocation3 [shape = 'u8[512]{0}', space=vmem, size = 0x400, scoped, tag = 'output window, operand 0, single buffered']
    #allocation4 [shape = 's32[1]{0}', space=sflag, size = 0x4, scoped, tag = 'scoped memory for tpu_custom_call.1']
    %8 = vsyncpa [#allocation4], 0
    // Predicated region
    $region2: #{tpu_custom_call.1} parent=1 // pred_check
      _
    $region3: #{tpu_custom_call.1} parent=1 // pred_check_branch
      %10 = sbr.rel (0) target = $region5
    $region4: #{tpu_custom_call.1} parent=1 // pred_region
      _
    $region5: #{tpu_custom_call.1} parent=1 // pred_fallthru
      _
    // Predicated region
    $region6: #{tpu_custom_call.1} parent=1 // pred_check
      _
    $region7: #{tpu_custom_call.1} parent=1 // pred_check_branch
      %12 = sbr.rel (0) target = $region9
    $region8: #{tpu_custom_call.1} parent=1 // pred_region
      _
    $region9: #{tpu_custom_call.1} parent=1 // pred_fallthru
      _
    %s13 = sld [smem:[#allocation2]]
    %v14 = vld [vmem:[%s1] sm:$0x1]
    %v15 = vstv %s13
    %v16 = vmul.f32 %v14, %v15
    %v17 = vmax.f32 %v16, 0.0
    %18 = vst [vmem:[#allocation3] sm:$0x1] %v17
    // Predicated region
    $region10: #{tpu_custom_call.1} parent=1 // pred_check
      _
    $region11: #{tpu_custom_call.1} parent=1 // pred_check_branch
      %20 = sbr.rel (0) target = $region13
    $region12: #{tpu_custom_call.1} parent=1 // pred_region
      %s22 = ssub.s32 16, 16
      %23 = vsyncadd [#allocation4], %s22
      %s25 = sshll.u32 [#allocation3], 4
      %s26 = int_to_ptr.vmem [resolvable:$true] %s25
      %28 = dma.vmem_to_hbm [thread:$0]  %s26, 16, %s2, [#allocation4]
    $region13: #{tpu_custom_call.1} parent=1 // pred_fallthru
      _
    // Predicated region
    $region14: #{tpu_custom_call.1} parent=1 // pred_check
      _
    $region15: #{tpu_custom_call.1} parent=1 // pred_check_branch
      %30 = sbr.rel (0) target = $region17
    $region16: #{tpu_custom_call.1} parent=1 // pred_region
      %31 = dma.done [#allocation4], 16
    $region17: #{tpu_custom_call.1} parent=1 // pred_fallthru
      _
    %32 = vsyncpa [#allocation4], 1

</llo_original>
